<compile_context>
chip_gen: v7x
topology: tpu7x:2x2x1
jax: 0.10.0
libtpu: 0.0.40
codegen_flags: <defaults>
</compile_context>

<pallas_src>
import functools

import jax
import jax.numpy as jnp
from jax.experimental import pallas as pl
from jax.experimental.pallas import tpu as pltpu


def _mlp_kernel(x_ref, w0_ref, b_ref, w_ref, o_ref, *, n_layers, d_in, d_out):
    """One batch tile: run the whole padded MLP in VMEM.

    x_ref : (TM, d_in_pad)              narrow f32 input tile (d_in real lanes)
    w0_ref: (d_in_pad, D_PAD)           first-layer weight, f32, resident
    b_ref : (n_layers, 1, D_PAD)        all biases, f32, resident
    w_ref : (n_layers-1, D_PAD, D_PAD)  layer 1..L-1 weights (bf16 or f32)
    o_ref : (TM, d_out)                 narrow f32 output tile
    """
    x = x_ref[...].astype(jnp.float32)                        # (TM, d_in_pad)

    # ---- layer 0: tiny fan-in (e.g. 2) -> rank-1 MACs on the VPU ----
    h = x[:, 0:1] * w0_ref[0:1, :].astype(jnp.float32)        # (TM, D_PAD)
    for j in range(1, d_in):
        h = h + x[:, j:j + 1] * w0_ref[j:j + 1, :].astype(jnp.float32)
    h = h + b_ref[0]                                           # (1, D_PAD) bcast
    if n_layers > 1:
        h = jnp.tanh(h)

    # ---- layers 1..L-1: MXU matmuls, low-precision in / f32 accumulation ----
    for l in range(1, n_layers):
        z = jnp.dot(h.astype(w_ref.dtype), w_ref[l - 1],
                    preferred_element_type=jnp.float32) + b_ref[l]
        # tanh over all padded lanes is exact (padded lanes stay 0: tanh(0)=0).
        h = jnp.tanh(z) if l < n_layers - 1 else z

    # Narrow store: only the real d_out lanes go back to HBM.
    o_ref[...] = h[:, :d_out].astype(o_ref.dtype)


def pack_params(weights, biases, *, d_pad=128, compute_dtype=jnp.bfloat16):
    """Pad & stack parameters once per parameter update (hoisted out of the
    per-call forward path).  Weights are stored (fan_in, fan_out): y = x@W + b.

    Returns (w0, b_stack, w_stack):
      w0      (d_in_pad, d_pad)           f32
      b_stack (n_layers, 1, d_pad)        f32
      w_stack (n_layers-1, d_pad, d_pad)  compute_dtype
    """
    n_layers = len(weights)
    assert n_layers >= 2, "Pallas path expects at least one hidden layer"
    d_in = weights[0].shape[0]
    d_in_pad = max(8, -(-d_in // 8) * 8)

    w0 = jnp.zeros((d_in_pad, d_pad), jnp.float32)
    w0 = w0.at[:d_in, :weights[0].shape[1]].set(weights[0].astype(jnp.float32))

    b_stack = jnp.zeros((n_layers, 1, d_pad), jnp.float32)
    for l, b in enumerate(biases):
        b_stack = b_stack.at[l, 0, :b.shape[0]].set(b.astype(jnp.float32))

    w_stack = jnp.zeros((n_layers - 1, d_pad, d_pad), jnp.float32)
    for l in range(1, n_layers):
        fi, fo = weights[l].shape
        w_stack = w_stack.at[l - 1, :fi, :fo].set(weights[l].astype(jnp.float32))

    return w0, b_stack, w_stack.astype(compute_dtype)


def _choose_tile(n, tm_request):
    """Pick the batch tile: as large as requested, but keep >=2 grid steps when
    the batch allows (v7x megacore) and always a multiple of 8 sublanes."""
    n8 = -(-n // 8) * 8
    tm = min(max(8, -(-tm_request // 8) * 8), n8)
    if n8 > 8 and n8 // tm < 2:
        tm = max(8, ((n8 // 2) // 8) * 8)
    n_pad = -(-n // tm) * tm
    return tm, n_pad


def mlp_forward_pallas(x, w0, b_stack, w_stack, *, d_in, d_out, tm=1024):
    """Forward pass of sequential_model via a single Pallas kernel.

    x: (N, d_in) float32.  (w0, b_stack, w_stack) from pack_params().
    Returns (N, d_out) float32.
    """
    n = x.shape[0]
    n_layers = b_stack.shape[0]
    d_in_pad, d_pad = w0.shape
    tm_eff, n_pad = _choose_tile(n, tm)

    # Narrow (8-lane) padded input; padded rows/lanes are zero and harmless.
    x_p = jnp.zeros((n_pad, d_in_pad), jnp.float32).at[:n, :d_in].set(
        x.astype(jnp.float32))

    grid = (n_pad // tm_eff,)
    cost = pl.CostEstimate(
        flops=2 * n_pad * d_pad * (d_in + d_pad * (n_layers - 1)),
        transcendentals=n_pad * d_pad * (n_layers - 1),
        bytes_accessed=(x_p.size * 4 + w0.size * 4 + b_stack.size * 4
                        + w_stack.size * w_stack.dtype.itemsize
                        + n_pad * d_out * 4),
    )

    out_p = pl.pallas_call(
        functools.partial(_mlp_kernel, n_layers=n_layers, d_in=d_in,
                          d_out=d_out),
        out_shape=jax.ShapeDtypeStruct((n_pad, d_out), jnp.float32),
        grid_spec=pltpu.PrefetchScalarGridSpec(
            num_scalar_prefetch=0,
            grid=grid,
            in_specs=[
                pl.BlockSpec((tm_eff, d_in_pad), lambda i: (i, 0)),      # x tile
                pl.BlockSpec((d_in_pad, d_pad), lambda i: (0, 0)),       # W0
                pl.BlockSpec((n_layers, 1, d_pad), lambda i: (0, 0, 0)),  # biases
                pl.BlockSpec((n_layers - 1, d_pad, d_pad),
                             lambda i: (0, 0, 0)),                       # W1..L-1
            ],
            out_specs=pl.BlockSpec((tm_eff, d_out), lambda i: (i, 0)),
        ),
        compiler_params=pltpu.CompilerParams(
            dimension_semantics=("parallel",)),
        cost_estimate=cost,
    )(x_p, w0, b_stack, w_stack)

    return out_p[:n]


def init_params(layers, key):
    """Xavier-normal weights (gain=1), zero biases — matches module __init__."""
    weights, biases = [], []
    for i in range(len(layers) - 1):
        key, sub = jax.random.split(key)
        fan_in, fan_out = layers[i], layers[i + 1]
        std = (2.0 / (fan_in + fan_out)) ** 0.5
        # stored as (fan_in, fan_out) so forward is x @ W + b
        w = std * jax.random.normal(sub, (fan_in, fan_out), jnp.float32)
        b = jnp.zeros((fan_out,), jnp.float32)
        weights.append(w)
        biases.append(b)
    return weights, biases


def mlp_forward_ref(x, weights, biases):
    h = x
    for l, (w, b) in enumerate(zip(weights, biases)):
        z = h @ w + b
        h = jnp.tanh(z) if l < len(weights) - 1 else z
    return h


if __name__ == "__main__":
    # layers = [2, 32, 32, 1]: input [x, t], two tanh hidden layers, scalar u.
    layers = [2, 32, 32, 1]
    key = jax.random.PRNGKey(0)
    key, kx = jax.random.split(key)
    weights, biases = init_params(layers, key)

    batch = 64
    x = jax.random.normal(kx, (batch, layers[0]), jnp.float32)
    u_ref = mlp_forward_ref(x, weights, biases)

    d_in, d_out = layers[0], layers[-1]
    fwd = jax.jit(functools.partial(mlp_forward_pallas,
                                    d_in=d_in, d_out=d_out, tm=1024))

    # f32 path: exact-semantics check against the XLA reference.
    params_f32 = pack_params(weights, biases, compute_dtype=jnp.float32)
    u_f32 = jax.block_until_ready(fwd(x, *params_f32))
    assert u_f32.shape == (batch, d_out)
    assert jnp.allclose(u_f32, u_ref, atol=1e-5, rtol=1e-5)

    # bf16 fast path (default packing): bf16 MXU matmuls with f32 accumulation.
    params_bf16 = pack_params(weights, biases, compute_dtype=jnp.bfloat16)
    u_bf16 = jax.block_until_ready(fwd(x, *params_bf16))
    assert u_bf16.shape == (batch, d_out)
    assert jnp.allclose(u_bf16, u_ref, atol=3e-2, rtol=3e-2)

    print("KERNEL_OK")
</pallas_src>

<mosaic_0001>
module attributes {stable_mosaic.version = 11 : i64} {
  func.func @_mlp_kernel(%arg0: i32, %arg1: memref<32x8xf32, #tpu.memory_space<vmem>>, %arg2: memref<8x128xf32, #tpu.memory_space<vmem>>, %arg3: memref<3x1x128xf32, #tpu.memory_space<vmem>>, %arg4: memref<2x128x128xf32, #tpu.memory_space<vmem>>, %arg5: memref<32x1xf32, #tpu.memory_space<vmem>>) attributes {dimension_semantics = [#tpu.dimension_semantics<parallel>], iteration_bounds = array<i64: 2>, scalar_prefetch = 0 : i64, scratch_operands = 0 : i64, tpu.core_type = #tpu.core_type<tc>, window_params = [{transform_indices = @transform_0, window_bounds = array<i64: 32, 8>}, {pipeline_mode = #tpu.pipeline_mode<synchronous>, transform_indices = @transform_1, window_bounds = array<i64: 8, 128>}, {pipeline_mode = #tpu.pipeline_mode<synchronous>, transform_indices = @transform_2, window_bounds = array<i64: 3, 1, 128>}, {pipeline_mode = #tpu.pipeline_mode<synchronous>, transform_indices = @transform_3, window_bounds = array<i64: 2, 128, 128>}, {transform_indices = @transform_4, window_bounds = array<i64: 32, 1>}]} {
    %c0 = arith.constant 0 : index
    %c0_0 = arith.constant 0 : index
    %0 = vector.load %arg1[%c0, %c0_0] : memref<32x8xf32, #tpu.memory_space<vmem>>, vector<32x8xf32>
    %1 = vector.extract_strided_slice %0 {offsets = [0, 0], sizes = [32, 1], strides = [1, 1]} : vector<32x8xf32> to vector<32x1xf32>
    %c0_1 = arith.constant 0 : index
    %c0_2 = arith.constant 0 : index
    %2 = vector.load %arg2[%c0_1, %c0_2] : memref<8x128xf32, #tpu.memory_space<vmem>>, vector<1x128xf32>
    %3 = vector.broadcast %1 : vector<32x1xf32> to vector<32x128xf32>
    %4 = vector.broadcast %2 : vector<1x128xf32> to vector<32x128xf32>
    %5 = arith.mulf %3, %4 : vector<32x128xf32>
    %6 = vector.extract_strided_slice %0 {offsets = [0, 1], sizes = [32, 1], strides = [1, 1]} : vector<32x8xf32> to vector<32x1xf32>
    %c1 = arith.constant 1 : index
    %c0_3 = arith.constant 0 : index
    %7 = vector.load %arg2[%c1, %c0_3] : memref<8x128xf32, #tpu.memory_space<vmem>>, vector<1x128xf32>
    %8 = vector.broadcast %6 : vector<32x1xf32> to vector<32x128xf32>
    %9 = vector.broadcast %7 : vector<1x128xf32> to vector<32x128xf32>
    %10 = arith.mulf %8, %9 : vector<32x128xf32>
    %11 = arith.addf %5, %10 : vector<32x128xf32>
    %c0_4 = arith.constant 0 : index
    %c0_5 = arith.constant 0 : index
    %c0_6 = arith.constant 0 : index
    %12 = vector.load %arg3[%c0_4, %c0_5, %c0_6] : memref<3x1x128xf32, #tpu.memory_space<vmem>>, vector<1x1x128xf32>
    %13 = vector.shape_cast %12 : vector<1x1x128xf32> to vector<1x128xf32>
    %14 = vector.broadcast %13 : vector<1x128xf32> to vector<32x128xf32>
    %15 = arith.addf %11, %14 : vector<32x128xf32>
    %16 = math.tanh %15 : vector<32x128xf32>
    %c0_7 = arith.constant 0 : index
    %c0_8 = arith.constant 0 : index
    %c0_9 = arith.constant 0 : index
    %17 = vector.load %arg4[%c0_7, %c0_8, %c0_9] : memref<2x128x128xf32, #tpu.memory_space<vmem>>, vector<1x128x128xf32>
    %18 = vector.shape_cast %17 : vector<1x128x128xf32> to vector<128x128xf32>
    %cst = arith.constant dense<0.000000e+00> : vector<32x128xf32>
    %19 = tpu.matmul %16, %18, %cst {dimension_numbers = #tpu.dot_dimension_numbers<[1], [0], [0], [1], [0, 0, 1, 1], [], []>} : vector<32x128xf32>, vector<128x128xf32>, vector<32x128xf32> -> vector<32x128xf32>
    %c1_10 = arith.constant 1 : index
    %c0_11 = arith.constant 0 : index
    %c0_12 = arith.constant 0 : index
    %20 = vector.load %arg3[%c1_10, %c0_11, %c0_12] : memref<3x1x128xf32, #tpu.memory_space<vmem>>, vector<1x1x128xf32>
    %21 = vector.shape_cast %20 : vector<1x1x128xf32> to vector<1x128xf32>
    %22 = vector.broadcast %21 : vector<1x128xf32> to vector<32x128xf32>
    %23 = arith.addf %19, %22 : vector<32x128xf32>
    %24 = math.tanh %23 : vector<32x128xf32>
    %c1_13 = arith.constant 1 : index
    %c0_14 = arith.constant 0 : index
    %c0_15 = arith.constant 0 : index
    %25 = vector.load %arg4[%c1_13, %c0_14, %c0_15] : memref<2x128x128xf32, #tpu.memory_space<vmem>>, vector<1x128x128xf32>
    %26 = vector.shape_cast %25 : vector<1x128x128xf32> to vector<128x128xf32>
    %cst_16 = arith.constant dense<0.000000e+00> : vector<32x128xf32>
    %27 = tpu.matmul %24, %26, %cst_16 {dimension_numbers = #tpu.dot_dimension_numbers<[1], [0], [0], [1], [0, 0, 1, 1], [], []>} : vector<32x128xf32>, vector<128x128xf32>, vector<32x128xf32> -> vector<32x128xf32>
    %c2 = arith.constant 2 : index
    %c0_17 = arith.constant 0 : index
    %c0_18 = arith.constant 0 : index
    %28 = vector.load %arg3[%c2, %c0_17, %c0_18] : memref<3x1x128xf32, #tpu.memory_space<vmem>>, vector<1x1x128xf32>
    %29 = vector.shape_cast %28 : vector<1x1x128xf32> to vector<1x128xf32>
    %30 = vector.broadcast %29 : vector<1x128xf32> to vector<32x128xf32>
    %31 = arith.addf %27, %30 : vector<32x128xf32>
    %32 = vector.extract_strided_slice %31 {offsets = [0, 0], sizes = [32, 1], strides = [1, 1]} : vector<32x128xf32> to vector<32x1xf32>
    %c0_19 = arith.constant 0 : index
    %c0_20 = arith.constant 0 : index
    %33 = vector.load %arg5[%c0_19, %c0_20] : memref<32x1xf32, #tpu.memory_space<vmem>>, vector<32x1xf32>
    tpu.vector_store %arg5[%c0_19, %c0_20], %32 {strides = array<i32>} : memref<32x1xf32, #tpu.memory_space<vmem>>, vector<32x1xf32>,
    return
  }
  func.func @transform_0(%arg0: i32) -> (i32, i32) {
    %c0_i32 = arith.constant 0 : i32
    %c0_i32_0 = arith.constant 0 : i32
    return %arg0, %c0_i32 : i32, i32
  }
  func.func @transform_1(%arg0: i32) -> (i32, i32) {
    %c0_i32 = arith.constant 0 : i32
    %c0_i32_0 = arith.constant 0 : i32
    %c0_i32_1 = arith.constant 0 : i32
    return %c0_i32, %c0_i32_0 : i32, i32
  }
  func.func @transform_2(%arg0: i32) -> (i32, i32, i32) {
    %c0_i32 = arith.constant 0 : i32
    %c0_i32_0 = arith.constant 0 : i32
    %c0_i32_1 = arith.constant 0 : i32
    %c0_i32_2 = arith.constant 0 : i32
    return %c0_i32, %c0_i32_0, %c0_i32_1 : i32, i32, i32
  }
  func.func @transform_3(%arg0: i32) -> (i32, i32, i32) {
    %c0_i32 = arith.constant 0 : i32
    %c0_i32_0 = arith.constant 0 : i32
    %c0_i32_1 = arith.constant 0 : i32
    %c0_i32_2 = arith.constant 0 : i32
    return %c0_i32, %c0_i32_0, %c0_i32_1 : i32, i32, i32
  }
  func.func @transform_4(%arg0: i32) -> (i32, i32) {
    %c0_i32 = arith.constant 0 : i32
    %c0_i32_0 = arith.constant 0 : i32
    return %arg0, %c0_i32 : i32, i32
  }
}

</mosaic_0001>

<llo_original>
// kernel: mlp_forward_pallas.1
$region0: #{mlp_forward_pallas.1}
  #allocation0 [shape = 'u32[]', space=smem, size = 0x4, offset = 0x4, fixed_abs, tag = 'smem constant byte address 0x4 - core index']
  #allocation1 [shape = 'u32[144,128]{1,0:T(1,128)}', space=vmem, size = 0x12000, scoped, tag = 'internal scratch']
  %s0 = inlined_call_operand.vmem [shape: f32[64,8], index: 0, kind: input, shape index: {}]
  %s1 = inlined_call_operand.vmem [shape: f32[8,128], index: 1, kind: input, shape index: {}]
  %s2 = inlined_call_operand.vmem [shape: f32[3,1,128], index: 2, kind: input, shape index: {}]
  %s3 = inlined_call_operand.vmem [shape: f32[2,128,128], index: 3, kind: input, shape index: {}]
  %s4 = inlined_call_operand.vmem [shape: f32[64,1], index: 4, kind: output, shape index: {}]
  %s5 = sld [smem:[#allocation0]]
  $region49: #{mlp_forward_pallas.1} parent=0
    _
  %s7 = ssub.s32 1, %s5
  %s8 = scalar_select 0, %s7, %s5
  loop: start=0, step=1, limit=4
  $region2: #{mlp_forward_pallas.1} parent=0 // loop_pre_header
    _
  $region3: #{mlp_forward_pallas.1} parent=0 // loop_header
    %s10 = sphi 0, %s14
    %p11 = scmp.ge.s32.totalorder %s10, 4
    %s20 = sphi 0, %s22
    %s23 = sphi 0, %s20
    %s24 = sphi 0, %s23
    %s40 = sphi 0, %s24
    %s44 = sphi 0, %s44
    %s46 = sphi 0, %s44
    %s47 = sphi 0, %s46
    %s61 = sphi 0, %s47
    %s65 = sphi 0, %s65
    %s67 = sphi 0, %s65
    %s68 = sphi 0, %s67
    %s82 = sphi 0, %s68
    %s86 = sphi 0, %s86
    %s88 = sphi 0, %s86
    %s89 = sphi 0, %s88
    %s103 = sphi 0, %s89
    %s109 = sphi 0, %s111
    %s112 = sphi 0, %s109
    %s113 = sphi 0, %s112
    %s129 = sphi 0, %s113
  $region4: #{mlp_forward_pallas.1} parent=0 // loop_header_branch
    %13 = sbr.rel (%p11) target = $region8
  $region5: #{mlp_forward_pallas.1} parent=0 // loop_body
    %s15 = ssub.s32 %s10, 1
    %s16 = ssub.s32 %s10, 2
    %s17 = sadd.s32 %s10, 1
    %s18 = ssub.s32 %s10, %s17
    %p19 = scmp.eq.s32.totalorder %s18, 0
    %s21 = sadd.s32 %s20, 1
    %s22 = scalar_select %p19, %s20, %s21
    %p25 = pneg %p19
    %p26 = scmp.eq.s32.totalorder %s10, 1
    %p27 = por %p25, %p26
    %p28 = scmp.ne.s32.totalorder %s20, %s23
    %p29 = scmp.eq.s32.totalorder %s10, 0
    %p30 = por %p28, %p29
    %p31 = scmp.ne.s32.totalorder %s20, %s23
    %p32 = scmp.eq.s32.totalorder %s15, 1
    %p33 = por %p31, %p32
    %p34 = scmp.ne.s32.totalorder %s23, %s24
    %p35 = scmp.eq.s32.totalorder %s15, 0
    %p36 = por %p34, %p35
    %p37 = scmp.ne.s32.totalorder %s23, %s24
    %p38 = scmp.eq.s32.totalorder %s16, 1
    %p39 = por %p37, %p38
    %p41 = scmp.ne.s32.totalorder %s24, %s40
    %p42 = scmp.eq.s32.totalorder %s16, 0
    %p43 = por %p41, %p42
    %s45 = sadd.s32 %s44, 1
    %p48 = scmp.eq.s32.totalorder %s10, 1
    %p49 = scmp.ne.s32.totalorder %s44, %s46
    %p50 = scmp.eq.s32.totalorder %s10, 0
    %p51 = por %p49, %p50
    %p52 = scmp.ne.s32.totalorder %s44, %s46
    %p53 = scmp.eq.s32.totalorder %s15, 1
    %p54 = por %p52, %p53
    %p55 = scmp.ne.s32.totalorder %s46, %s47
    %p56 = scmp.eq.s32.totalorder %s15, 0
    %p57 = por %p55, %p56
    %p58 = scmp.ne.s32.totalorder %s46, %s47
    %p59 = scmp.eq.s32.totalorder %s16, 1
    %p60 = por %p58, %p59
    %p62 = scmp.ne.s32.totalorder %s47, %s61
    %p63 = scmp.eq.s32.totalorder %s16, 0
    %p64 = por %p62, %p63
    %s66 = sadd.s32 %s65, 1
    %p69 = scmp.eq.s32.totalorder %s10, 1
    %p70 = scmp.ne.s32.totalorder %s65, %s67
    %p71 = scmp.eq.s32.totalorder %s10, 0
    %p72 = por %p70, %p71
    %p73 = scmp.ne.s32.totalorder %s65, %s67
    %p74 = scmp.eq.s32.totalorder %s15, 1
    %p75 = por %p73, %p74
    %p76 = scmp.ne.s32.totalorder %s67, %s68
    %p77 = scmp.eq.s32.totalorder %s15, 0
    %p78 = por %p76, %p77
    %p79 = scmp.ne.s32.totalorder %s67, %s68
    %p80 = scmp.eq.s32.totalorder %s16, 1
    %p81 = por %p79, %p80
    %p83 = scmp.ne.s32.totalorder %s68, %s82
    %p84 = scmp.eq.s32.totalorder %s16, 0
    %p85 = por %p83, %p84
    %s87 = sadd.s32 %s86, 1
    %p90 = scmp.eq.s32.totalorder %s10, 1
    %p91 = scmp.ne.s32.totalorder %s86, %s88
    %p92 = scmp.eq.s32.totalorder %s10, 0
    %p93 = por %p91, %p92
    %p94 = scmp.ne.s32.totalorder %s86, %s88
    %p95 = scmp.eq.s32.totalorder %s15, 1
    %p96 = por %p94, %p95
    %p97 = scmp.ne.s32.totalorder %s88, %s89
    %p98 = scmp.eq.s32.totalorder %s15, 0
    %p99 = por %p97, %p98
    %p100 = scmp.ne.s32.totalorder %s88, %s89
    %p101 = scmp.eq.s32.totalorder %s16, 1
    %p102 = por %p100, %p101
    %p104 = scmp.ne.s32.totalorder %s89, %s103
    %p105 = scmp.eq.s32.totalorder %s16, 0
    %p106 = por %p104, %p105
    %s107 = ssub.s32 %s10, %s17
    %p108 = scmp.eq.s32.totalorder %s107, 0
    %s110 = sadd.s32 %s109, 1
    %s111 = scalar_select %p108, %s109, %s110
    %p114 = pneg %p108
    %p115 = scmp.eq.s32.totalorder %s10, 1
    %p116 = por %p114, %p115
    %p117 = scmp.ne.s32.totalorder %s109, %s112
    %p118 = scmp.eq.s32.totalorder %s10, 0
    %p119 = por %p117, %p118
    %p120 = scmp.ne.s32.totalorder %s109, %s112
    %p121 = scmp.eq.s32.totalorder %s15, 1
    %p122 = por %p120, %p121
    %p123 = scmp.ne.s32.totalorder %s112, %s113
    %p124 = scmp.eq.s32.totalorder %s15, 0
    %p125 = por %p123, %p124
    %p126 = scmp.ne.s32.totalorder %s112, %s113
    %p127 = scmp.eq.s32.totalorder %s16, 1
    %p128 = por %p126, %p127
    %p130 = scmp.ne.s32.totalorder %s113, %s129
    %p131 = scmp.eq.s32.totalorder %s16, 0
    %p132 = por %p130, %p131
    %p133 = scmp.le.s32.totalorder 1, %s10
    %p134 = scmp.lt.s32.totalorder %s10, 3
    %p135 = pnand %p133, %p134
    %p136 = pneg %p135
    // Predicated region
    $region9: #{mlp_forward_pallas.1} parent=5 // pred_check
      _
    $region10: #{mlp_forward_pallas.1} parent=5 // pred_check_branch
      %138 = sbr.rel (%p135) target = $region12
    $region11: #{mlp_forward_pallas.1} parent=5 // pred_region
      %s139 = ssub.s32 %s10, 1
      // Predicated region
      $region13: #{mlp_forward_pallas.1} parent=11 // pred_check
        %p140 = pneg %p57
      $region14: #{mlp_forward_pallas.1} parent=11 // pred_check_branch
        %142 = sbr.rel (%p140) target = $region16
      $region15: #{mlp_forward_pallas.1} parent=11 // pred_region
        _
      $region16: #{mlp_forward_pallas.1} parent=11 // pred_fallthru
        _
      // Predicated region
      $region17: #{mlp_forward_pallas.1} parent=11 // pred_check
        %p143 = pneg %p78
      $region18: #{mlp_forward_pallas.1} parent=11 // pred_check_branch
        %145 = sbr.rel (%p143) target = $region20
      $region19: #{mlp_forward_pallas.1} parent=11 // pred_region
        _
      $region20: #{mlp_forward_pallas.1} parent=11 // pred_fallthru
        _
      // Predicated region
      $region21: #{mlp_forward_pallas.1} parent=11 // pred_check
        %p146 = pneg %p99
      $region22: #{mlp_forward_pallas.1} parent=11 // pred_check_branch
        %148 = sbr.rel (%p146) target = $region24
      $region23: #{mlp_forward_pallas.1} parent=11 // pred_region
        _
      $region24: #{mlp_forward_pallas.1} parent=11 // pred_fallthru
        _
    $region12: #{mlp_forward_pallas.1} parent=5 // pred_fallthru
      _
    %p149 = scmp.lt.s32.totalorder %s10, 2
    // Predicated region
    $region25: #{mlp_forward_pallas.1} parent=5 // pred_check
      %p150 = pneg %p149
    $region26: #{mlp_forward_pallas.1} parent=5 // pred_check_branch
      %152 = sbr.rel (%p150) target = $region28
    $region27: #{mlp_forward_pallas.1} parent=5 // pred_region
      // Predicated region
      $region29: #{mlp_forward_pallas.1} parent=27 // pred_check
        %p153 = pneg %p30
      $region30: #{mlp_forward_pallas.1} parent=27 // pred_check_branch
        %155 = sbr.rel (%p153) target = $region32
      $region31: #{mlp_forward_pallas.1} parent=27 // pred_region
        %s156 = smul.u32 4, %s10
        %p157 = scmp.lt.s32.totalorder %s156, 7
        %s158 = scalar_select %p157, %s156, 7
        %s159 = smul.addr %s158, 8
        %s160 = scalar_lea.vmem %s0, %s159
        %s161 = smul.u32 4, %s10
      $region32: #{mlp_forward_pallas.1} parent=27 // pred_fallthru
        _
    $region28: #{mlp_forward_pallas.1} parent=5 // pred_fallthru
      _
    %p162 = scmp.le.s32.totalorder 1, %s10
    %p163 = scmp.lt.s32.totalorder %s10, 3
    %p164 = pnand %p162, %p163
    %p165 = pneg %p164
    // Predicated region
    $region33: #{mlp_forward_pallas.1} parent=5 // pred_check
      _
    $region34: #{mlp_forward_pallas.1} parent=5 // pred_check_branch
      %167 = sbr.rel (%p164) target = $region36
    $region35: #{mlp_forward_pallas.1} parent=5 // pred_region
      %s168 = ssub.s32 %s10, 1
      %s169 = smul.u32 4, %s15
      %p170 = scmp.lt.s32.totalorder %s169, 7
      %s171 = scalar_select %p170, %s169, 7
      %s172 = smul.addr %s171, 8
      %s173 = scalar_lea.vmem %s0, %s172
      %p174 = pneg %p36
      %p175 = pneg %p33
      %p176 = pneg %p57
      %p177 = pneg %p54
      %p178 = pneg %p78
      %p179 = pneg %p75
      %p180 = pneg %p99
      %p181 = pneg %p96
      %p182 = pneg %p125
      %p183 = pneg %p122
      %s184 = smul.u32 4, %s15
      %p185 = scmp.lt.s32.totalorder %s184, 7
      %s186 = scalar_select %p185, %s184, 7
      %s187 = smul.addr %s186, 8
      %s188 = scalar_lea.vmem %s4, %s187
      %s189 = smul.u32 4, %s15
      %p190 = scmp.lt.s32.totalorder %s189, 7
      %s191 = scalar_select %p190, %s189, 7
      %s192 = smul.addr %s191, 8
      %s193 = scalar_lea.vmem %s0, %s192
      %s194 = smul.u32 4, %s15
      %s195 = smul.u32 4, %s15
      %p196 = scmp.lt.s32.totalorder %s195, 7
      %s197 = scalar_select %p196, %s195, 7
      %s198 = smul.addr %s197, 8
      %s199 = scalar_lea.vmem %s4, %s198
      %s200 = smul.u32 4, %s15
      %v201 = vld [vmem:[%s193] sm:$0xff]
      %v202 = vld [vmem:[%s193 + $0x8] sm:$0xff]
      %v203 = vld [vmem:[%s193 + $0x10] sm:$0xff]
      %v204 = vld [vmem:[%s193 + $0x18] sm:$0xff]
      %v205 = vld [vmem:[%s1] sm:$0x1]
      %207 = vset.pattern.permute.xlu0 0
      %208 = vperm.xlu0 %207, %v201
      %v209 = vpop.permute.xlu0 %208
      %212 = vset.pattern.permute.xlu0 0
      %213 = vperm.xlu0 %212, %v202
      %v214 = vpop.permute.xlu0 %213
      %217 = vset.pattern.permute.xlu0 0
      %218 = vperm.xlu0 %217, %v203
      %v219 = vpop.permute.xlu0 %218
      %222 = vset.pattern.permute.xlu0 0
      %223 = vperm.xlu0 %222, %v204
      %v224 = vpop.permute.xlu0 %223
      %v226 = vlaneseq
      %v227 = vshrl.u32 %v226, 7
      %v228 = vsub.s32 0, %v227
      %v229 = vrot.slane %v205, %v228
      %v230 = vmul.f32 %v209, %v229
      %v231 = vmul.f32 %v214, %v229
      %v232 = vmul.f32 %v219, %v229
      %v233 = vmul.f32 %v224, %v229
      %v234 = vld [vmem:[%s1 + $0x1] sm:$0x1]
      %235 = vset.pattern.permute.xlu0 1
      %236 = vperm.xlu0 %235, %v201
      %v237 = vpop.permute.xlu0 %236
      %239 = vset.pattern.permute.xlu0 1
      %240 = vperm.xlu0 %239, %v202
      %v241 = vpop.permute.xlu0 %240
      %243 = vset.pattern.permute.xlu0 1
      %244 = vperm.xlu0 %243, %v203
      %v245 = vpop.permute.xlu0 %244
      %247 = vset.pattern.permute.xlu0 1
      %248 = vperm.xlu0 %247, %v204
      %v249 = vpop.permute.xlu0 %248
      %v251 = vlaneseq
      %v252 = vshrl.u32 %v251, 7
      %v253 = vsub.s32 0, %v252
      %v254 = vrot.slane %v234, %v253
      %v255 = vmul.f32 %v237, %v254
      %v256 = vmul.f32 %v241, %v254
      %v257 = vmul.f32 %v245, %v254
      %v258 = vmul.f32 %v249, %v254
      %v259 = vadd.f32 %v230, %v255
      %v260 = vadd.f32 %v231, %v256
      %v261 = vadd.f32 %v232, %v257
      %v262 = vadd.f32 %v233, %v258
      %v263 = vld [vmem:[%s2] sm:$0x1]
      %v265 = vlaneseq
      %v266 = vshrl.u32 %v265, 7
      %v267 = vsub.s32 0, %v266
      %v268 = vrot.slane %v263, %v267
      %v270 = vadd.f32 %v259, %v268
      %v271 = vadd.f32 %v260, %v268
      %v272 = vadd.f32 %v261, %v268
      %v273 = vadd.f32 %v262, %v268
      %v274 = vtanh.pop %v270
      %v275 = vtanh.pop %v271
      %v276 = vtanh.pop %v272
      %v277 = vtanh.pop %v273
      %v278 = vld [vmem:[%s3] sm:$0xff]
      %v279 = vld [vmem:[%s3 + $0x8] sm:$0xff]
      %v280 = vld [vmem:[%s3 + $0x10] sm:$0xff]
      %v281 = vld [vmem:[%s3 + $0x18] sm:$0xff]
      %v282 = vld [vmem:[%s3 + $0x20] sm:$0xff]
      %v283 = vld [vmem:[%s3 + $0x28] sm:$0xff]
      %v284 = vld [vmem:[%s3 + $0x30] sm:$0xff]
      %v285 = vld [vmem:[%s3 + $0x38] sm:$0xff]
      %v286 = vld [vmem:[%s3 + $0x40] sm:$0xff]
      %v287 = vld [vmem:[%s3 + $0x48] sm:$0xff]
      %v288 = vld [vmem:[%s3 + $0x50] sm:$0xff]
      %v289 = vld [vmem:[%s3 + $0x58] sm:$0xff]
      %v290 = vld [vmem:[%s3 + $0x60] sm:$0xff]
      %v291 = vld [vmem:[%s3 + $0x68] sm:$0xff]
      %v292 = vld [vmem:[%s3 + $0x70] sm:$0xff]
      %v293 = vld [vmem:[%s3 + $0x78] sm:$0xff]
      %s294 = scalar_lea.vmem %s2, 1
      %v295 = vld [vmem:[%s294] sm:$0x1]
      %v297 = vlaneseq
      %v298 = vshrl.u32 %v297, 7
      %v299 = vsub.s32 0, %v298
      %v300 = vrot.slane %v295, %v299
      %302 = vmatprep.subr.mxu0 0.0
      %303 = vmatpush1.msra.mxu0 %v278
      %304 = vmatprep.subr.mxu0 0.0
      %305 = vmatpush1.msra.mxu0 %v279
      %306 = vmatprep.subr.mxu0 0.0
      %307 = vmatpush1.msra.mxu0 %v280
      %308 = vmatprep.subr.mxu0 0.0
      %309 = vmatpush1.msra.mxu0 %v281
      %310 = vmatprep.subr.mxu0 0.0
      %311 = vmatpush1.msra.mxu0 %v282
      %312 = vmatprep.subr.mxu0 0.0
      %313 = vmatpush1.msra.mxu0 %v283
      %314 = vmatprep.subr.mxu0 0.0
      %315 = vmatpush1.msra.mxu0 %v284
      %316 = vmatprep.subr.mxu0 0.0
      %317 = vmatpush1.msra.mxu0 %v285
      %318 = vmatprep.subr.mxu0 0.0
      %319 = vmatpush1.msra.mxu0 %v286
      %320 = vmatprep.subr.mxu0 0.0
      %321 = vmatpush1.msra.mxu0 %v287
      %322 = vmatprep.subr.mxu0 0.0
      %323 = vmatpush1.msra.mxu0 %v288
      %324 = vmatprep.subr.mxu0 0.0
      %325 = vmatpush1.msra.mxu0 %v289
      %326 = vmatprep.subr.mxu0 0.0
      %327 = vmatpush1.msra.mxu0 %v290
      %328 = vmatprep.subr.mxu0 0.0
      %329 = vmatpush1.msra.mxu0 %v291
      %330 = vmatprep.subr.mxu0 0.0
      %331 = vmatpush1.msra.mxu0 %v292
      %332 = vmatprep.subr.mxu0 0.0
      %333 = vmatpush1.msra.mxu0 %v293
      %334 = vmatprep.subr.mxu0 0.0
      %335 = vmatpush1.msra.mxu0 0.0
      %336 = vmatprep.subr.mxu0 0.0
      %337 = vmatpush1.msra.mxu0 0.0
      %338 = vmatprep.subr.mxu0 0.0
      %339 = vmatpush1.msra.mxu0 0.0
      %340 = vmatprep.subr.mxu0 0.0
      %341 = vmatpush1.msra.mxu0 0.0
      %342 = vmatprep.subr.mxu0 0.0
      %343 = vmatpush1.msra.mxu0 0.0
      %344 = vmatprep.subr.mxu0 0.0
      %345 = vmatpush1.msra.mxu0 0.0
      %346 = vmatprep.subr.mxu0 0.0
      %347 = vmatpush1.msra.mxu0 0.0
      %348 = vmatprep.subr.mxu0 0.0
      %349 = vmatpush1.msra.mxu0 0.0
      %350 = vmatprep.subr.mxu0 0.0
      %351 = vmatpush1.msra.mxu0 0.0
      %352 = vmatprep.subr.mxu0 0.0
      %353 = vmatpush1.msra.mxu0 0.0
      %354 = vmatprep.subr.mxu0 0.0
      %355 = vmatpush1.msra.mxu0 0.0
      %356 = vmatprep.subr.mxu0 0.0
      %357 = vmatpush1.msra.mxu0 0.0
      %358 = vmatprep.subr.mxu0 0.0
      %359 = vmatpush1.msra.mxu0 0.0
      %360 = vmatprep.subr.mxu0 0.0
      %361 = vmatpush1.msra.mxu0 0.0
      %362 = vmatprep.subr.mxu0 0.0
      %363 = vmatpush1.msra.mxu0 0.0
      %364 = vmatprep.subr.mxu0 0.0
      %365 = vmatpush1.msra.mxu0 0.0
      %366 = vmatprep.mubr.f32.mxu0 0.0
      %367 = vmatmul.mubr.f32.gmra.mrb[0].mxu0 %v274
      %v368 = vpop.f32.mrb[0].mxu0
      %v369 = vadd.f32 %v300, %v368
      %v370 = vpop.f32.mrb[0].mxu0
      %371 = vmatprep.mubr.f32.mxu0 0.0
      %372 = vmatmul.mubr.f32.gmra.mrb[0].mxu0 %v275
      %v373 = vpop.f32.mrb[0].mxu0
      %v374 = vadd.f32 %v300, %v373
      %v375 = vpop.f32.mrb[0].mxu0
      %376 = vmatprep.mubr.f32.mxu0 0.0
      %377 = vmatmul.mubr.f32.gmra.mrb[0].mxu0 %v276
      %v378 = vpop.f32.mrb[0].mxu0
      %v379 = vadd.f32 %v300, %v378
      %v380 = vpop.f32.mrb[0].mxu0
      %381 = vmatprep.mubr.f32.mxu0 0.0
      %382 = vmatmul.mubr.f32.gmra.mrb[0].mxu0 %v277
      %v383 = vpop.f32.mrb[0].mxu0
      %v384 = vadd.f32 %v300, %v383
      %v385 = vpop.f32.mrb[0].mxu0
      %386 = vdwg.mxu0
      %v387 = vtanh.pop %v369
      %v388 = vtanh.pop %v374
      %v389 = vtanh.pop %v379
      %v390 = vtanh.pop %v384
      %s391 = scalar_lea.vmem %s3, 128
      %v392 = vld [vmem:[%s391] sm:$0xff]
      %v393 = vld [vmem:[%s391 + $0x8] sm:$0xff]
      %v394 = vld [vmem:[%s391 + $0x10] sm:$0xff]
      %v395 = vld [vmem:[%s391 + $0x18] sm:$0xff]
      %v396 = vld [vmem:[%s391 + $0x20] sm:$0xff]
      %v397 = vld [vmem:[%s391 + $0x28] sm:$0xff]
      %v398 = vld [vmem:[%s391 + $0x30] sm:$0xff]
      %v399 = vld [vmem:[%s391 + $0x38] sm:$0xff]
      %v400 = vld [vmem:[%s391 + $0x40] sm:$0xff]
      %v401 = vld [vmem:[%s391 + $0x48] sm:$0xff]
      %v402 = vld [vmem:[%s391 + $0x50] sm:$0xff]
      %v403 = vld [vmem:[%s391 + $0x58] sm:$0xff]
      %v404 = vld [vmem:[%s391 + $0x60] sm:$0xff]
      %v405 = vld [vmem:[%s391 + $0x68] sm:$0xff]
      %v406 = vld [vmem:[%s391 + $0x70] sm:$0xff]
      %v407 = vld [vmem:[%s391 + $0x78] sm:$0xff]
      %s408 = scalar_lea.vmem %s2, 2
      %v409 = vld [vmem:[%s408] sm:$0x1]
      %v411 = vlaneseq
      %v412 = vshrl.u32 %v411, 7
      %v413 = vsub.s32 0, %v412
      %v414 = vrot.slane %v409, %v413
      %416 = vmatprep.subr.mxu0 0.0
      %417 = vmatpush1.msra.mxu0 %v392
      %418 = vmatprep.subr.mxu0 0.0
      %419 = vmatpush1.msra.mxu0 %v393
      %420 = vmatprep.subr.mxu0 0.0
      %421 = vmatpush1.msra.mxu0 %v394
      %422 = vmatprep.subr.mxu0 0.0
      %423 = vmatpush1.msra.mxu0 %v395
      %424 = vmatprep.subr.mxu0 0.0
      %425 = vmatpush1.msra.mxu0 %v396
      %426 = vmatprep.subr.mxu0 0.0
      %427 = vmatpush1.msra.mxu0 %v397
      %428 = vmatprep.subr.mxu0 0.0
      %429 = vmatpush1.msra.mxu0 %v398
      %430 = vmatprep.subr.mxu0 0.0
      %431 = vmatpush1.msra.mxu0 %v399
      %432 = vmatprep.subr.mxu0 0.0
      %433 = vmatpush1.msra.mxu0 %v400
      %434 = vmatprep.subr.mxu0 0.0
      %435 = vmatpush1.msra.mxu0 %v401
      %436 = vmatprep.subr.mxu0 0.0
      %437 = vmatpush1.msra.mxu0 %v402
      %438 = vmatprep.subr.mxu0 0.0
      %439 = vmatpush1.msra.mxu0 %v403
      %440 = vmatprep.subr.mxu0 0.0
      %441 = vmatpush1.msra.mxu0 %v404
      %442 = vmatprep.subr.mxu0 0.0
      %443 = vmatpush1.msra.mxu0 %v405
      %444 = vmatprep.subr.mxu0 0.0
      %445 = vmatpush1.msra.mxu0 %v406
      %446 = vmatprep.subr.mxu0 0.0
      %447 = vmatpush1.msra.mxu0 %v407
      %448 = vmatprep.subr.mxu0 0.0
      %449 = vmatpush1.msra.mxu0 0.0
      %450 = vmatprep.subr.mxu0 0.0
      %451 = vmatpush1.msra.mxu0 0.0
      %452 = vmatprep.subr.mxu0 0.0
      %453 = vmatpush1.msra.mxu0 0.0
      %454 = vmatprep.subr.mxu0 0.0
      %455 = vmatpush1.msra.mxu0 0.0
      %456 = vmatprep.subr.mxu0 0.0
      %457 = vmatpush1.msra.mxu0 0.0
      %458 = vmatprep.subr.mxu0 0.0
      %459 = vmatpush1.msra.mxu0 0.0
      %460 = vmatprep.subr.mxu0 0.0
      %461 = vmatpush1.msra.mxu0 0.0
      %462 = vmatprep.subr.mxu0 0.0
      %463 = vmatpush1.msra.mxu0 0.0
      %464 = vmatprep.subr.mxu0 0.0
      %465 = vmatpush1.msra.mxu0 0.0
      %466 = vmatprep.subr.mxu0 0.0
      %467 = vmatpush1.msra.mxu0 0.0
      %468 = vmatprep.subr.mxu0 0.0
      %469 = vmatpush1.msra.mxu0 0.0
      %470 = vmatprep.subr.mxu0 0.0
      %471 = vmatpush1.msra.mxu0 0.0
      %472 = vmatprep.subr.mxu0 0.0
      %473 = vmatpush1.msra.mxu0 0.0
      %474 = vmatprep.subr.mxu0 0.0
      %475 = vmatpush1.msra.mxu0 0.0
      %476 = vmatprep.subr.mxu0 0.0
      %477 = vmatpush1.msra.mxu0 0.0
      %478 = vmatprep.subr.mxu0 0.0
      %479 = vmatpush1.msra.mxu0 0.0
      %480 = vmatprep.mubr.f32.mxu0 0.0
      %481 = vmatmul.mubr.f32.gmra.mrb[0].mxu0 %v387
      %v482 = vpop.f32.mrb[0].mxu0
      %v483 = vadd.f32 %v414, %v482
      %v484 = vpop.f32.mrb[0].mxu0
      %485 = vmatprep.mubr.f32.mxu0 0.0
      %486 = vmatmul.mubr.f32.gmra.mrb[0].mxu0 %v388
      %v487 = vpop.f32.mrb[0].mxu0
      %v488 = vadd.f32 %v414, %v487
      %v489 = vpop.f32.mrb[0].mxu0
      %490 = vmatprep.mubr.f32.mxu0 0.0
      %491 = vmatmul.mubr.f32.gmra.mrb[0].mxu0 %v389
      %v492 = vpop.f32.mrb[0].mxu0
      %v493 = vadd.f32 %v414, %v492
      %v494 = vpop.f32.mrb[0].mxu0
      %495 = vmatprep.mubr.f32.mxu0 0.0
      %496 = vmatmul.mubr.f32.gmra.mrb[0].mxu0 %v390
      %v497 = vpop.f32.mrb[0].mxu0
      %v498 = vadd.f32 %v414, %v497
      %v499 = vpop.f32.mrb[0].mxu0
      %500 = vdwg.mxu0
      %vm501 = vcmask 7168
      %502 = vst.msk [vmem:[%s199] sm:$0xff] %vm501, %v483
      %503 = vst.msk [vmem:[%s199 + $0x8] sm:$0xff] %vm501, %v488
      %504 = vst.msk [vmem:[%s199 + $0x10] sm:$0xff] %vm501, %v493
      %505 = vst.msk [vmem:[%s199 + $0x18] sm:$0xff] %vm501, %v498
      %s506 = smul.u32 4, %s15
      %p507 = scmp.lt.s32.totalorder %s506, 7
      %s508 = scalar_select %p507, %s506, 7
      %s509 = smul.addr %s508, 8
      %s510 = scalar_lea.vmem %s4, %s509
      // Predicated region
      $region37: #{mlp_forward_pallas.1} parent=35 // pred_check
        %p511 = pneg %p122
      $region38: #{mlp_forward_pallas.1} parent=35 // pred_check_branch
        %513 = sbr.rel (%p511) target = $region40
      $region39: #{mlp_forward_pallas.1} parent=35 // pred_region
        %s514 = smul.u32 4, %s15
      $region40: #{mlp_forward_pallas.1} parent=35 // pred_fallthru
        _
    $region36: #{mlp_forward_pallas.1} parent=5 // pred_fallthru
      _
    %p515 = scmp.le.s32.totalorder 2, %s10
    // Predicated region
    $region41: #{mlp_forward_pallas.1} parent=5 // pred_check
      %p516 = pneg %p515
    $region42: #{mlp_forward_pallas.1} parent=5 // pred_check_branch
      %518 = sbr.rel (%p516) target = $region44
    $region43: #{mlp_forward_pallas.1} parent=5 // pred_region
      %s519 = ssub.s32 %s10, 2
      // Predicated region
      $region45: #{mlp_forward_pallas.1} parent=43 // pred_check
        %p520 = pneg %p128
      $region46: #{mlp_forward_pallas.1} parent=43 // pred_check_branch
        %522 = sbr.rel (%p520) target = $region48
      $region47: #{mlp_forward_pallas.1} parent=43 // pred_region
        %s523 = smul.u32 4, %s16
        %p524 = scmp.lt.s32.totalorder %s523, 7
        %s525 = scalar_select %p524, %s523, 7
        %s526 = smul.addr %s525, 8
        %s527 = scalar_lea.vmem %s4, %s526
      $region48: #{mlp_forward_pallas.1} parent=43 // pred_fallthru
        _
    $region44: #{mlp_forward_pallas.1} parent=5 // pred_fallthru
      _
  $region6: #{mlp_forward_pallas.1} parent=0 // loop_footer
    %s14 = sadd.s32 1, %s10
  $region7: #{mlp_forward_pallas.1} parent=0 // loop_footer_branch
    %9 = sbr.rel target = $region3
  $region8: #{mlp_forward_pallas.1} parent=0 // loop_exit
    _

</llo_original>
